<compile_context>
chip_gen: v7x
topology: tpu7x:2x2x1
jax: 0.10.0
libtpu: 0.0.40
codegen_flags: <defaults>
</compile_context>

<pallas_src>
import math
import numpy as np
import jax
import jax.numpy as jnp
from jax.experimental import pallas as pl
from jax.experimental.pallas import tpu as pltpu

# ---------------- problem sizes (small, consistent with the module) ----------
L = 8            # number of queries (tgt length)
S = 16           # memory length
B = 2            # batch
E = 32           # d_model
NHEAD = 4
DH = E // NHEAD  # 8
G = B * NHEAD    # 8 (batch, head) groups
GS = G * S       # 128 -> lane-dense score width
BE = B * E       # 64
BE2 = 2 * BE     # 128 -> fused [K|V] lane width
LN_EPS = 1e-5

# ----- packed-constant-slab row offsets (all 8-aligned) ----------------------
C_WQ, C_WKV, C_MASK, C_SEG, C_BQ, C_BKV = 0, 128, 256, 384, 512, 520   # const128 (536,128)
D_WO, D_LN, D_BO, D_GAMMA, D_BETA = 0, 128, 192, 200, 208              # const64  (216, 64)


# ---------------------------- Pallas kernel ----------------------------------
def cross_attn_kernel(act_ref, c128_ref, c64_ref, out_ref):
    f32 = jnp.float32
    act_q = act_ref[0:L, :]                      # (L, 128): [tgt | tgt+query_pos]
    x_kv = act_ref[L:L + S, :]                   # (S, 128): [mem+pos | mem]

    wq_full = c128_ref[C_WQ:C_WQ + BE2, :]       # (128,128) Q weight (scale folded, pre-padded)
    w_kv = c128_ref[C_WKV:C_WKV + BE2, :]        # (128,128) fused block-diag [K|V] weight
    kv_mask = c128_ref[C_MASK:C_MASK + GS, :]    # (128,128) (batch,head) group mask
    seg_brd = c128_ref[C_SEG:C_SEG + GS, :]      # (128,128) softmax segment-sum broadcaster
    bq_b = c128_ref[C_BQ:C_BQ + L, :]            # (L,128)   q bias (scaled, V-half zero)
    bkv_b = c128_ref[C_BKV:C_BKV + S, :]         # (S,128)   [bk | bv]

    wo_pad = c64_ref[D_WO:D_WO + BE2, :]         # (128,64)  out-proj weight (K-half rows zero)
    ln_brd = c64_ref[D_LN:D_LN + BE, :]          # (64,64)   LayerNorm segment-mean matrix (1/E folded)
    bo_b = c64_ref[D_BO:D_BO + L, :]             # (L,64)
    gamma_b = c64_ref[D_GAMMA:D_GAMMA + L, :]    # (L,64)
    beta_b = c64_ref[D_BETA:D_BETA + L, :]       # (L,64)

    # In-projections: one matmul for Q (1/sqrt(DH) already folded into weight AND bias;
    # output lanes 64..127 are zero), one fused 128-lane matmul for [K|V].
    q_pad = jnp.dot(act_q, wq_full, preferred_element_type=f32) + bq_b     # (L, 128)
    kv = jnp.dot(x_kv, w_kv, preferred_element_type=f32) + bkv_b           # (S, 128) = [K|V]

    # Stack to (G*S, 128) with (batch,head)-group masking: one tile drives both the score
    # contraction (K half) and the context matmul (V half).
    kv_stack = jnp.concatenate([kv] * G, axis=0) * kv_mask                 # (128, 128)

    # scores[l, g*S+s] = <Q[l, lanes of g], K[s, lanes of g]>; Q's zero V-half lanes kill
    # the V columns.  A @ B^T contraction pattern (same as flash-attention's qk einsum).
    scores = jax.lax.dot_general(q_pad, kv_stack, (((1,), (1,)), ((), ())),
                                 preferred_element_type=f32)               # (L, G*S) = (8, 128)
    # TODO(synk): memory_mask / memory_key_padding_mask would be added here as -inf biases;
    # switch to per-segment max (via seg_brd) + zero-sum guard when that happens.

    # Softmax over each S-lane segment: global-row-max subtraction cancels exactly in the
    # per-segment normalization; segment sums broadcast back via one indicator matmul.
    p = jnp.exp(scores - jnp.max(scores, axis=-1, keepdims=True))
    seg_sum = jnp.dot(p, seg_brd, preferred_element_type=f32)              # (L, 128) per-lane segment sum
    # approx=True (EUP vrcp) could exceed the 1e-4 tolerance; exact divide is negligible here.
    p_norm = p * pl.reciprocal(seg_sum, approx=False)

    # Context lands in the V-half lanes, already in concatenated-heads layout.
    ctx = jnp.dot(p_norm, kv_stack, preferred_element_type=f32)            # (L, 128)
    # Out-projection (zero-padded rows ignore the K-half garbage) + residual (dropout p=0).
    attn = jnp.dot(ctx, wo_pad, preferred_element_type=f32) + bo_b         # (L, 64)
    x = act_q[:, 0:BE] + attn                                              # (L, 64)

    # LayerNorm over each batch's E lanes via indicator matmuls (lane-dense, MXU).
    mu = jnp.dot(x, ln_brd, preferred_element_type=f32)                    # per-segment mean
    xc = x - mu
    var = jnp.dot(xc * xc, ln_brd, preferred_element_type=f32)             # per-segment variance
    y = xc * jax.lax.rsqrt(var + LN_EPS) * gamma_b + beta_b
    out_ref[...] = y.astype(out_ref.dtype)


# ---------------------- one-time parameter packing (init path) ----------------
def prepare_constants(params):
    """Packs all weights/biases + trace-time constant matrices into two slabs.
    Called ONCE at init; nothing here is on the per-call path."""
    f32 = jnp.float32
    scale = 1.0 / math.sqrt(DH)
    w_in, b_in = params["in_proj_weight"], params["in_proj_bias"]
    wq, wk, wv = w_in[0:E], w_in[E:2 * E], w_in[2 * E:3 * E]
    bq, bk, bv = b_in[0:E] * scale, b_in[E:2 * E], b_in[2 * E:3 * E]

    eye_b = jnp.eye(B, dtype=f32)
    wqT_bd = jnp.kron(eye_b, wq.T) * scale                      # (BE,BE) block-diag, pre-transposed
    wkT_bd = jnp.kron(eye_b, wk.T)
    wvT_bd = jnp.kron(eye_b, wv.T)
    woT_bd = jnp.kron(eye_b, params["out_proj_weight"].T)

    # Q weight lifted to the 128-lane slab: the tgt+query_pos lanes (rows BE..) feed output
    # lanes 0..BE-1; everything else zero so the padded Q has zero V-half lanes.
    wq_full = jnp.zeros((BE2, BE2), f32).at[BE:, :BE].set(wqT_bd)
    # Fused [K|V] in-projection weight: block-diag([wkT_bd, wvT_bd]).
    w_kv = (jnp.zeros((BE2, BE2), f32)
            .at[:BE, :BE].set(wkT_bd)
            .at[BE:, BE:].set(wvT_bd))

    # (batch,head) group mask + softmax segment broadcaster (trace-time constants).
    rows = np.arange(GS)
    lanes = np.arange(BE2)
    kv_mask = jnp.asarray((rows[:, None] // S) == ((lanes[None, :] % BE) // DH), f32)
    seg_brd = jnp.asarray((rows[:, None] // S) == (rows[None, :] // S), f32)

    bq_row = jnp.concatenate([jnp.tile(bq, B), jnp.zeros((BE,), f32)])
    bkv_row = jnp.concatenate([jnp.tile(bk, B), jnp.tile(bv, B)])
    const128 = jnp.concatenate([
        wq_full, w_kv, kv_mask, seg_brd,
        jnp.broadcast_to(bq_row, (L, BE2)),
        jnp.broadcast_to(bkv_row, (S, BE2)),
    ], axis=0).astype(f32)                                      # (536, 128)

    wo_pad = jnp.zeros((BE2, BE), f32).at[BE:, :].set(woT_bd)   # (128, 64)
    e_idx = np.arange(BE)
    ln_brd = jnp.asarray((e_idx[:, None] // E) == (e_idx[None, :] // E), f32) / E
    const64 = jnp.concatenate([
        wo_pad, ln_brd,
        jnp.broadcast_to(jnp.tile(params["out_proj_bias"], B), (L, BE)),
        jnp.broadcast_to(jnp.tile(params["norm_weight"], B), (L, BE)),
        jnp.broadcast_to(jnp.tile(params["norm_bias"], B), (L, BE)),
    ], axis=0).astype(f32)                                      # (216, 64)
    return const128, const64


# ---------------------------- per-call wrapper ---------------------------------
def cross_attention_layer(tgt, memory, query_pos, pos, const128, const64):
    """tgt/query_pos: (L,B,E); memory/pos: (S,B,E); const* from prepare_constants."""
    tgt2 = tgt.reshape(L, BE)                    # contiguous reshapes only (free)
    q_in = tgt2 + query_pos.reshape(L, BE)
    mem2 = memory.reshape(S, BE)
    k_in = mem2 + pos.reshape(S, BE)
    # Single lane-dense activation slab: rows 0..L-1 = [tgt | tgt+query_pos],
    # rows L..L+S-1 = [memory+pos | memory].
    act = jnp.concatenate([
        jnp.concatenate([tgt2, q_in], axis=1),
        jnp.concatenate([k_in, mem2], axis=1),
    ], axis=0)                                   # (L+S, 128)

    out2 = pl.pallas_call(
        cross_attn_kernel,
        out_shape=jax.ShapeDtypeStruct((L, BE), tgt.dtype),
        in_specs=[pl.BlockSpec(memory_space=pltpu.MemorySpace.VMEM)] * 3,
        out_specs=pl.BlockSpec(memory_space=pltpu.MemorySpace.VMEM),
    )(act, const128, const64)
    # TODO(synk): at production Mask2Former sizes (9+ decoder layers, ~100 queries), add a
    # grid over layers / query tiles with dimension_semantics=("parallel",) to amortize the
    # per-call dispatch cost and use both v7x TensorCores; single-shot is right at toy size.
    return out2.reshape(L, B, E)


# ---------------------------- reference (pure JAX) -----------------------------
def reference(tgt, memory, query_pos, pos, params):
    hp = jax.lax.Precision.HIGHEST
    q = tgt + query_pos
    k = memory + pos
    v = memory
    w, b = params["in_proj_weight"], params["in_proj_bias"]
    Q = jnp.einsum("lbe,fe->lbf", q, w[0:E], precision=hp) + b[0:E]
    K = jnp.einsum("sbe,fe->sbf", k, w[E:2 * E], precision=hp) + b[E:2 * E]
    V = jnp.einsum("sbe,fe->sbf", v, w[2 * E:3 * E], precision=hp) + b[2 * E:3 * E]
    Q = Q.reshape(L, B, NHEAD, DH)
    K = K.reshape(S, B, NHEAD, DH)
    V = V.reshape(S, B, NHEAD, DH)
    scores = jnp.einsum("lbhd,sbhd->bhls", Q, K, precision=hp) / math.sqrt(DH)
    p = jax.nn.softmax(scores, axis=-1)
    o = jnp.einsum("bhls,sbhd->lbhd", p, V, precision=hp).reshape(L, B, E)
    o = jnp.einsum("lbe,fe->lbf", o, params["out_proj_weight"], precision=hp) + params["out_proj_bias"]
    x = tgt + o
    mean = jnp.mean(x, -1, keepdims=True)
    var = jnp.mean((x - mean) ** 2, -1, keepdims=True)
    return (x - mean) / jnp.sqrt(var + LN_EPS) * params["norm_weight"] + params["norm_bias"]


# ---------------------------- main ---------------------------------------------
def xavier_uniform(key, shape):
    fan_in, fan_out = shape[1], shape[0]
    a = math.sqrt(6.0 / (fan_in + fan_out))
    return jax.random.uniform(key, shape, jnp.float32, -a, a)


if __name__ == "__main__":
    key = jax.random.PRNGKey(0)
    (k_tgt, k_mem, k_qp, k_p, k_w1, k_w2,
     k_b1, k_b2, k_g, k_be) = jax.random.split(key, 10)

    tgt = jax.random.normal(k_tgt, (L, B, E), jnp.float32)
    memory = jax.random.normal(k_mem, (S, B, E), jnp.float32)
    query_pos = jax.random.normal(k_qp, (L, B, E), jnp.float32)
    pos = jax.random.normal(k_p, (S, B, E), jnp.float32)

    # nn.MultiheadAttention / LayerNorm parameter shapes.  The module inits biases to 0
    # and LN to (1, 0); small random values keep the same forward semantics while
    # exercising every kernel path in the correctness check.
    params = {
        "in_proj_weight": xavier_uniform(k_w1, (3 * E, E)),
        "in_proj_bias": 0.1 * jax.random.normal(k_b1, (3 * E,), jnp.float32),
        "out_proj_weight": xavier_uniform(k_w2, (E, E)),
        "out_proj_bias": 0.1 * jax.random.normal(k_b2, (E,), jnp.float32),
        "norm_weight": 1.0 + 0.1 * jax.random.normal(k_g, (E,), jnp.float32),
        "norm_bias": 0.1 * jax.random.normal(k_be, (E,), jnp.float32),
    }

    # One-time init-path packing (kron / transposes / bias tiling / masks): NOT per-call.
    const128, const64 = prepare_constants(params)

    run = jax.jit(cross_attention_layer)
    out = jax.block_until_ready(run(tgt, memory, query_pos, pos, const128, const64))
    ref = jax.block_until_ready(reference(tgt, memory, query_pos, pos, params))

    assert out.shape == (L, B, E)
    np.testing.assert_allclose(np.asarray(out), np.asarray(ref), rtol=1e-4, atol=1e-4)
    print("KERNEL_OK")
</pallas_src>

<mosaic_0001>
module attributes {stable_mosaic.version = 11 : i64} {
  func.func @cross_attn_kernel(%arg0: memref<24x128xf32, #tpu.memory_space<vmem>>, %arg1: memref<536x128xf32, #tpu.memory_space<vmem>>, %arg2: memref<216x64xf32, #tpu.memory_space<vmem>>, %arg3: memref<8x64xf32, #tpu.memory_space<vmem>>) attributes {dimension_semantics = [], scalar_prefetch = 0 : i64, scratch_operands = 0 : i64, tpu.core_type = #tpu.core_type<tc>} {
    %c0 = arith.constant 0 : index
    %c0_0 = arith.constant 0 : index
    %0 = vector.load %arg0[%c0, %c0_0] : memref<24x128xf32, #tpu.memory_space<vmem>>, vector<8x128xf32>
    %c8 = arith.constant 8 : index
    %c0_1 = arith.constant 0 : index
    %1 = vector.load %arg0[%c8, %c0_1] : memref<24x128xf32, #tpu.memory_space<vmem>>, vector<16x128xf32>
    %c0_2 = arith.constant 0 : index
    %c0_3 = arith.constant 0 : index
    %2 = vector.load %arg1[%c0_2, %c0_3] : memref<536x128xf32, #tpu.memory_space<vmem>>, vector<128x128xf32>
    %c128 = arith.constant 128 : index
    %c0_4 = arith.constant 0 : index
    %3 = vector.load %arg1[%c128, %c0_4] : memref<536x128xf32, #tpu.memory_space<vmem>>, vector<128x128xf32>
    %c256 = arith.constant 256 : index
    %c0_5 = arith.constant 0 : index
    %4 = vector.load %arg1[%c256, %c0_5] : memref<536x128xf32, #tpu.memory_space<vmem>>, vector<128x128xf32>
    %c384 = arith.constant 384 : index
    %c0_6 = arith.constant 0 : index
    %5 = vector.load %arg1[%c384, %c0_6] : memref<536x128xf32, #tpu.memory_space<vmem>>, vector<128x128xf32>
    %c512 = arith.constant 512 : index
    %c0_7 = arith.constant 0 : index
    %6 = vector.load %arg1[%c512, %c0_7] : memref<536x128xf32, #tpu.memory_space<vmem>>, vector<8x128xf32>
    %c520 = arith.constant 520 : index
    %c0_8 = arith.constant 0 : index
    %7 = vector.load %arg1[%c520, %c0_8] : memref<536x128xf32, #tpu.memory_space<vmem>>, vector<16x128xf32>
    %c0_9 = arith.constant 0 : index
    %c0_10 = arith.constant 0 : index
    %8 = vector.load %arg2[%c0_9, %c0_10] : memref<216x64xf32, #tpu.memory_space<vmem>>, vector<128x64xf32>
    %c128_11 = arith.constant 128 : index
    %c0_12 = arith.constant 0 : index
    %9 = vector.load %arg2[%c128_11, %c0_12] : memref<216x64xf32, #tpu.memory_space<vmem>>, vector<64x64xf32>
    %c192 = arith.constant 192 : index
    %c0_13 = arith.constant 0 : index
    %10 = vector.load %arg2[%c192, %c0_13] : memref<216x64xf32, #tpu.memory_space<vmem>>, vector<8x64xf32>
    %c200 = arith.constant 200 : index
    %c0_14 = arith.constant 0 : index
    %11 = vector.load %arg2[%c200, %c0_14] : memref<216x64xf32, #tpu.memory_space<vmem>>, vector<8x64xf32>
    %c208 = arith.constant 208 : index
    %c0_15 = arith.constant 0 : index
    %12 = vector.load %arg2[%c208, %c0_15] : memref<216x64xf32, #tpu.memory_space<vmem>>, vector<8x64xf32>
    %cst = arith.constant dense<0.000000e+00> : vector<8x128xf32>
    %13 = tpu.matmul %0, %2, %cst {dimension_numbers = #tpu.dot_dimension_numbers<[1], [0], [0], [1], [0, 0, 1, 1], [], []>} : vector<8x128xf32>, vector<128x128xf32>, vector<8x128xf32> -> vector<8x128xf32>
    %14 = arith.addf %13, %6 : vector<8x128xf32>
    %cst_16 = arith.constant dense<0.000000e+00> : vector<16x128xf32>
    %15 = tpu.matmul %1, %3, %cst_16 {dimension_numbers = #tpu.dot_dimension_numbers<[1], [0], [0], [1], [0, 0, 1, 1], [], []>} : vector<16x128xf32>, vector<128x128xf32>, vector<16x128xf32> -> vector<16x128xf32>
    %16 = arith.addf %15, %7 : vector<16x128xf32>
    %17 = tpu.concatenate %16, %16, %16, %16, %16, %16, %16, %16 in 0 : vector<16x128xf32>, vector<16x128xf32>, vector<16x128xf32>, vector<16x128xf32>, vector<16x128xf32>, vector<16x128xf32>, vector<16x128xf32>, vector<16x128xf32> -> vector<128x128xf32>
    %18 = arith.mulf %17, %4 : vector<128x128xf32>
    %cst_17 = arith.constant dense<0.000000e+00> : vector<8x128xf32>
    %19 = tpu.matmul %14, %18, %cst_17 {dimension_numbers = #tpu.dot_dimension_numbers<[1], [1], [0], [0], [0, 0, 1, 0], [], []>} : vector<8x128xf32>, vector<128x128xf32>, vector<8x128xf32> -> vector<8x128xf32>
    %cst_18 = arith.constant dense<0xFF800000> : vector<8xf32>
    %20 = vector.multi_reduction <maximumf>, %19, %cst_18 [1] : vector<8x128xf32> to vector<8xf32>
    %21 = vector.shape_cast %20 : vector<8xf32> to vector<8x1xf32>
    %22 = vector.broadcast %21 : vector<8x1xf32> to vector<8x128xf32>
    %23 = arith.subf %19, %22 : vector<8x128xf32>
    %24 = math.exp %23 : vector<8x128xf32>
    %cst_19 = arith.constant dense<0.000000e+00> : vector<8x128xf32>
    %25 = tpu.matmul %24, %5, %cst_19 {dimension_numbers = #tpu.dot_dimension_numbers<[1], [0], [0], [1], [0, 0, 1, 1], [], []>} : vector<8x128xf32>, vector<128x128xf32>, vector<8x128xf32> -> vector<8x128xf32>
    %26 = tpu.reciprocal %25 : vector<8x128xf32> -> vector<8x128xf32>
    %27 = arith.mulf %24, %26 : vector<8x128xf32>
    %cst_20 = arith.constant dense<0.000000e+00> : vector<8x128xf32>
    %28 = tpu.matmul %27, %18, %cst_20 {dimension_numbers = #tpu.dot_dimension_numbers<[1], [0], [0], [1], [0, 0, 1, 1], [], []>} : vector<8x128xf32>, vector<128x128xf32>, vector<8x128xf32> -> vector<8x128xf32>
    %cst_21 = arith.constant dense<0.000000e+00> : vector<8x64xf32>
    %29 = tpu.matmul %28, %8, %cst_21 {dimension_numbers = #tpu.dot_dimension_numbers<[1], [0], [0], [1], [0, 0, 1, 1], [], []>} : vector<8x128xf32>, vector<128x64xf32>, vector<8x64xf32> -> vector<8x64xf32>
    %30 = arith.addf %29, %10 : vector<8x64xf32>
    %31 = vector.extract_strided_slice %0 {offsets = [0, 0], sizes = [8, 64], strides = [1, 1]} : vector<8x128xf32> to vector<8x64xf32>
    %32 = arith.addf %31, %30 : vector<8x64xf32>
    %cst_22 = arith.constant dense<0.000000e+00> : vector<8x64xf32>
    %33 = tpu.matmul %32, %9, %cst_22 {dimension_numbers = #tpu.dot_dimension_numbers<[1], [0], [0], [1], [0, 0, 1, 1], [], []>} : vector<8x64xf32>, vector<64x64xf32>, vector<8x64xf32> -> vector<8x64xf32>
    %34 = arith.subf %32, %33 : vector<8x64xf32>
    %35 = arith.mulf %34, %34 : vector<8x64xf32>
    %cst_23 = arith.constant dense<0.000000e+00> : vector<8x64xf32>
    %36 = tpu.matmul %35, %9, %cst_23 {dimension_numbers = #tpu.dot_dimension_numbers<[1], [0], [0], [1], [0, 0, 1, 1], [], []>} : vector<8x64xf32>, vector<64x64xf32>, vector<8x64xf32> -> vector<8x64xf32>
    %cst_24 = arith.constant 9.99999974E-6 : f32
    %37 = vector.broadcast %cst_24 : f32 to vector<8x64xf32>
    %38 = arith.addf %36, %37 : vector<8x64xf32>
    %39 = math.rsqrt %38 : vector<8x64xf32>
    %40 = arith.mulf %34, %39 : vector<8x64xf32>
    %41 = arith.mulf %40, %11 : vector<8x64xf32>
    %42 = arith.addf %41, %12 : vector<8x64xf32>
    %c0_25 = arith.constant 0 : index
    %c0_26 = arith.constant 0 : index
    %43 = vector.load %arg3[%c0_25, %c0_26] : memref<8x64xf32, #tpu.memory_space<vmem>>, vector<8x64xf32>
    tpu.vector_store %arg3[%c0_25, %c0_26], %42 {strides = array<i32>} : memref<8x64xf32, #tpu.memory_space<vmem>>, vector<8x64xf32>,
    return
  }
}

</mosaic_0001>

<llo_original>
// kernel: cross_attention_layer.1
$region0: #{cross_attention_layer.1}
  #allocation0 [shape = 'u32[]', space=smem, size = 0x4, offset = 0x4, fixed_abs, tag = 'smem constant byte address 0x4 - core index']
  #allocation1 [shape = 'u32[144,128]{1,0:T(1,128)}', space=vmem, size = 0x12000, scoped, tag = 'internal scratch']
  %s0 = inlined_call_operand.vmem [shape: f32[24,128], index: 0, kind: input, shape index: {}]
  %s1 = inlined_call_operand.vmem [shape: f32[536,128], index: 1, kind: input, shape index: {}]
  %s2 = inlined_call_operand.vmem [shape: f32[216,64], index: 2, kind: input, shape index: {}]
  %s3 = inlined_call_operand.vmem [shape: f32[8,64], index: 3, kind: output, shape index: {}]
  %s4 = sld [smem:[#allocation0]]
  $region22: #{cross_attention_layer.1} parent=0
    _
  %s6 = ssub.s32 1, %s4
  %s7 = scalar_select 0, %s6, %s4
  // Predicated region
  $region2: #{cross_attention_layer.1} parent=0 // pred_check
    _
  $region3: #{cross_attention_layer.1} parent=0 // pred_check_branch
    %9 = sbr.rel (0) target = $region5
  $region4: #{cross_attention_layer.1} parent=0 // pred_region
    _
  $region5: #{cross_attention_layer.1} parent=0 // pred_fallthru
    _
  // Predicated region
  $region6: #{cross_attention_layer.1} parent=0 // pred_check
    _
  $region7: #{cross_attention_layer.1} parent=0 // pred_check_branch
    %11 = sbr.rel (0) target = $region9
  $region8: #{cross_attention_layer.1} parent=0 // pred_region
    _
  $region9: #{cross_attention_layer.1} parent=0 // pred_fallthru
    _
  // Predicated region
  $region10: #{cross_attention_layer.1} parent=0 // pred_check
    _
  $region11: #{cross_attention_layer.1} parent=0 // pred_check_branch
    %13 = sbr.rel (0) target = $region13
  $region12: #{cross_attention_layer.1} parent=0 // pred_region
    _
  $region13: #{cross_attention_layer.1} parent=0 // pred_fallthru
    _
  %v14 = vld [vmem:[%s0] sm:$0xff]
  %v15 = vld [vmem:[%s0 + $0x8] sm:$0xff]
  %v16 = vld [vmem:[%s0 + $0x10] sm:$0xff]
  %v17 = vld [vmem:[%s1] sm:$0xff]
  %v18 = vld [vmem:[%s1 + $0x8] sm:$0xff]
  %v19 = vld [vmem:[%s1 + $0x10] sm:$0xff]
  %v20 = vld [vmem:[%s1 + $0x18] sm:$0xff]
  %v21 = vld [vmem:[%s1 + $0x20] sm:$0xff]
  %v22 = vld [vmem:[%s1 + $0x28] sm:$0xff]
  %v23 = vld [vmem:[%s1 + $0x30] sm:$0xff]
  %v24 = vld [vmem:[%s1 + $0x38] sm:$0xff]
  %v25 = vld [vmem:[%s1 + $0x40] sm:$0xff]
  %v26 = vld [vmem:[%s1 + $0x48] sm:$0xff]
  %v27 = vld [vmem:[%s1 + $0x50] sm:$0xff]
  %v28 = vld [vmem:[%s1 + $0x58] sm:$0xff]
  %v29 = vld [vmem:[%s1 + $0x60] sm:$0xff]
  %v30 = vld [vmem:[%s1 + $0x68] sm:$0xff]
  %v31 = vld [vmem:[%s1 + $0x70] sm:$0xff]
  %v32 = vld [vmem:[%s1 + $0x78] sm:$0xff]
  %v33 = vld [vmem:[%s1 + $0x80] sm:$0xff]
  %v34 = vld [vmem:[%s1 + $0x88] sm:$0xff]
  %v35 = vld [vmem:[%s1 + $0x90] sm:$0xff]
  %v36 = vld [vmem:[%s1 + $0x98] sm:$0xff]
  %v37 = vld [vmem:[%s1 + $0xa0] sm:$0xff]
  %v38 = vld [vmem:[%s1 + $0xa8] sm:$0xff]
  %v39 = vld [vmem:[%s1 + $0xb0] sm:$0xff]
  %v40 = vld [vmem:[%s1 + $0xb8] sm:$0xff]
  %v41 = vld [vmem:[%s1 + $0xc0] sm:$0xff]
  %v42 = vld [vmem:[%s1 + $0xc8] sm:$0xff]
  %v43 = vld [vmem:[%s1 + $0xd0] sm:$0xff]
  %v44 = vld [vmem:[%s1 + $0xd8] sm:$0xff]
  %v45 = vld [vmem:[%s1 + $0xe0] sm:$0xff]
  %v46 = vld [vmem:[%s1 + $0xe8] sm:$0xff]
  %v47 = vld [vmem:[%s1 + $0xf0] sm:$0xff]
  %v48 = vld [vmem:[%s1 + $0xf8] sm:$0xff]
  %v49 = vld [vmem:[%s1 + $0x100] sm:$0xff]
  %v50 = vld [vmem:[%s1 + $0x108] sm:$0xff]
  %v51 = vld [vmem:[%s1 + $0x110] sm:$0xff]
  %v52 = vld [vmem:[%s1 + $0x118] sm:$0xff]
  %v53 = vld [vmem:[%s1 + $0x120] sm:$0xff]
  %v54 = vld [vmem:[%s1 + $0x128] sm:$0xff]
  %v55 = vld [vmem:[%s1 + $0x130] sm:$0xff]
  %v56 = vld [vmem:[%s1 + $0x138] sm:$0xff]
  %v57 = vld [vmem:[%s1 + $0x140] sm:$0xff]
  %v58 = vld [vmem:[%s1 + $0x148] sm:$0xff]
  %v59 = vld [vmem:[%s1 + $0x150] sm:$0xff]
  %v60 = vld [vmem:[%s1 + $0x158] sm:$0xff]
  %v61 = vld [vmem:[%s1 + $0x160] sm:$0xff]
  %v62 = vld [vmem:[%s1 + $0x168] sm:$0xff]
  %v63 = vld [vmem:[%s1 + $0x170] sm:$0xff]
  %v64 = vld [vmem:[%s1 + $0x178] sm:$0xff]
  %v65 = vld [vmem:[%s1 + $0x180] sm:$0xff]
  %v66 = vld [vmem:[%s1 + $0x188] sm:$0xff]
  %v67 = vld [vmem:[%s1 + $0x190] sm:$0xff]
  %v68 = vld [vmem:[%s1 + $0x198] sm:$0xff]
  %v69 = vld [vmem:[%s1 + $0x1a0] sm:$0xff]
  %v70 = vld [vmem:[%s1 + $0x1a8] sm:$0xff]
  %v71 = vld [vmem:[%s1 + $0x1b0] sm:$0xff]
  %v72 = vld [vmem:[%s1 + $0x1b8] sm:$0xff]
  %v73 = vld [vmem:[%s1 + $0x1c0] sm:$0xff]
  %v74 = vld [vmem:[%s1 + $0x1c8] sm:$0xff]
  %v75 = vld [vmem:[%s1 + $0x1d0] sm:$0xff]
  %v76 = vld [vmem:[%s1 + $0x1d8] sm:$0xff]
  %v77 = vld [vmem:[%s1 + $0x1e0] sm:$0xff]
  %v78 = vld [vmem:[%s1 + $0x1e8] sm:$0xff]
  %v79 = vld [vmem:[%s1 + $0x1f0] sm:$0xff]
  %v80 = vld [vmem:[%s1 + $0x1f8] sm:$0xff]
  %v81 = vld [vmem:[%s1 + $0x200] sm:$0xff]
  %v82 = vld [vmem:[%s1 + $0x208] sm:$0xff]
  %v83 = vld [vmem:[%s1 + $0x210] sm:$0xff]
  %v84 = vld [vmem:[%s2] sm:$0xff]
  %v85 = vld [vmem:[%s2 + $0x8] sm:$0xff]
  %v86 = vld [vmem:[%s2 + $0x10] sm:$0xff]
  %v87 = vld [vmem:[%s2 + $0x18] sm:$0xff]
  %v88 = vld [vmem:[%s2 + $0x20] sm:$0xff]
  %v89 = vld [vmem:[%s2 + $0x28] sm:$0xff]
  %v90 = vld [vmem:[%s2 + $0x30] sm:$0xff]
  %v91 = vld [vmem:[%s2 + $0x38] sm:$0xff]
  %v92 = vld [vmem:[%s2 + $0x40] sm:$0xff]
  %v93 = vld [vmem:[%s2 + $0x48] sm:$0xff]
  %v94 = vld [vmem:[%s2 + $0x50] sm:$0xff]
  %v95 = vld [vmem:[%s2 + $0x58] sm:$0xff]
  %v96 = vld [vmem:[%s2 + $0x60] sm:$0xff]
  %v97 = vld [vmem:[%s2 + $0x68] sm:$0xff]
  %v98 = vld [vmem:[%s2 + $0x70] sm:$0xff]
  %v99 = vld [vmem:[%s2 + $0x78] sm:$0xff]
  %v100 = vld [vmem:[%s2 + $0x80] sm:$0xff]
  %v101 = vld [vmem:[%s2 + $0x88] sm:$0xff]
  %v102 = vld [vmem:[%s2 + $0x90] sm:$0xff]
  %v103 = vld [vmem:[%s2 + $0x98] sm:$0xff]
  %v104 = vld [vmem:[%s2 + $0xa0] sm:$0xff]
  %v105 = vld [vmem:[%s2 + $0xa8] sm:$0xff]
  %v106 = vld [vmem:[%s2 + $0xb0] sm:$0xff]
  %v107 = vld [vmem:[%s2 + $0xb8] sm:$0xff]
  %v108 = vld [vmem:[%s2 + $0xc0] sm:$0xff]
  %v109 = vld [vmem:[%s2 + $0xc8] sm:$0xff]
  %v110 = vld [vmem:[%s2 + $0xd0] sm:$0xff]
  %111 = vmatprep.subr.mxu0 0.0
  %112 = vmatpush1.msra.mxu0 %v17
  %113 = vmatprep.subr.mxu0 0.0
  %114 = vmatpush1.msra.mxu0 %v18
  %115 = vmatprep.subr.mxu0 0.0
  %116 = vmatpush1.msra.mxu0 %v19
  %117 = vmatprep.subr.mxu0 0.0
  %118 = vmatpush1.msra.mxu0 %v20
  %119 = vmatprep.subr.mxu0 0.0
  %120 = vmatpush1.msra.mxu0 %v21
  %121 = vmatprep.subr.mxu0 0.0
  %122 = vmatpush1.msra.mxu0 %v22
  %123 = vmatprep.subr.mxu0 0.0
  %124 = vmatpush1.msra.mxu0 %v23
  %125 = vmatprep.subr.mxu0 0.0
  %126 = vmatpush1.msra.mxu0 %v24
  %127 = vmatprep.subr.mxu0 0.0
  %128 = vmatpush1.msra.mxu0 %v25
  %129 = vmatprep.subr.mxu0 0.0
  %130 = vmatpush1.msra.mxu0 %v26
  %131 = vmatprep.subr.mxu0 0.0
  %132 = vmatpush1.msra.mxu0 %v27
  %133 = vmatprep.subr.mxu0 0.0
  %134 = vmatpush1.msra.mxu0 %v28
  %135 = vmatprep.subr.mxu0 0.0
  %136 = vmatpush1.msra.mxu0 %v29
  %137 = vmatprep.subr.mxu0 0.0
  %138 = vmatpush1.msra.mxu0 %v30
  %139 = vmatprep.subr.mxu0 0.0
  %140 = vmatpush1.msra.mxu0 %v31
  %141 = vmatprep.subr.mxu0 0.0
  %142 = vmatpush1.msra.mxu0 %v32
  %143 = vmatprep.subr.mxu0 0.0
  %144 = vmatpush1.msra.mxu0 0.0
  %145 = vmatprep.subr.mxu0 0.0
  %146 = vmatpush1.msra.mxu0 0.0
  %147 = vmatprep.subr.mxu0 0.0
  %148 = vmatpush1.msra.mxu0 0.0
  %149 = vmatprep.subr.mxu0 0.0
  %150 = vmatpush1.msra.mxu0 0.0
  %151 = vmatprep.subr.mxu0 0.0
  %152 = vmatpush1.msra.mxu0 0.0
  %153 = vmatprep.subr.mxu0 0.0
  %154 = vmatpush1.msra.mxu0 0.0
  %155 = vmatprep.subr.mxu0 0.0
  %156 = vmatpush1.msra.mxu0 0.0
  %157 = vmatprep.subr.mxu0 0.0
  %158 = vmatpush1.msra.mxu0 0.0
  %159 = vmatprep.subr.mxu0 0.0
  %160 = vmatpush1.msra.mxu0 0.0
  %161 = vmatprep.subr.mxu0 0.0
  %162 = vmatpush1.msra.mxu0 0.0
  %163 = vmatprep.subr.mxu0 0.0
  %164 = vmatpush1.msra.mxu0 0.0
  %165 = vmatprep.subr.mxu0 0.0
  %166 = vmatpush1.msra.mxu0 0.0
  %167 = vmatprep.subr.mxu0 0.0
  %168 = vmatpush1.msra.mxu0 0.0
  %169 = vmatprep.subr.mxu0 0.0
  %170 = vmatpush1.msra.mxu0 0.0
  %171 = vmatprep.subr.mxu0 0.0
  %172 = vmatpush1.msra.mxu0 0.0
  %173 = vmatprep.subr.mxu0 0.0
  %174 = vmatpush1.msra.mxu0 0.0
  %175 = vmatprep.mubr.f32.mxu0 0.0
  %176 = vmatmul.mubr.f32.gmra.mrb[0].mxu0 %v14
  %v177 = vpop.f32.mrb[0].mxu0
  %v178 = vadd.f32 %v81, %v177
  %v179 = vpop.f32.mrb[0].mxu0
  %180 = vdwg.mxu0
  %181 = vmatprep.subr.mxu0 0.0
  %182 = vmatpush1.msra.mxu0 %v33
  %183 = vmatprep.subr.mxu0 0.0
  %184 = vmatpush1.msra.mxu0 %v34
  %185 = vmatprep.subr.mxu0 0.0
  %186 = vmatpush1.msra.mxu0 %v35
  %187 = vmatprep.subr.mxu0 0.0
  %188 = vmatpush1.msra.mxu0 %v36
  %189 = vmatprep.subr.mxu0 0.0
  %190 = vmatpush1.msra.mxu0 %v37
  %191 = vmatprep.subr.mxu0 0.0
  %192 = vmatpush1.msra.mxu0 %v38
  %193 = vmatprep.subr.mxu0 0.0
  %194 = vmatpush1.msra.mxu0 %v39
  %195 = vmatprep.subr.mxu0 0.0
  %196 = vmatpush1.msra.mxu0 %v40
  %197 = vmatprep.subr.mxu0 0.0
  %198 = vmatpush1.msra.mxu0 %v41
  %199 = vmatprep.subr.mxu0 0.0
  %200 = vmatpush1.msra.mxu0 %v42
  %201 = vmatprep.subr.mxu0 0.0
  %202 = vmatpush1.msra.mxu0 %v43
  %203 = vmatprep.subr.mxu0 0.0
  %204 = vmatpush1.msra.mxu0 %v44
  %205 = vmatprep.subr.mxu0 0.0
  %206 = vmatpush1.msra.mxu0 %v45
  %207 = vmatprep.subr.mxu0 0.0
  %208 = vmatpush1.msra.mxu0 %v46
  %209 = vmatprep.subr.mxu0 0.0
  %210 = vmatpush1.msra.mxu0 %v47
  %211 = vmatprep.subr.mxu0 0.0
  %212 = vmatpush1.msra.mxu0 %v48
  %213 = vmatprep.subr.mxu0 0.0
  %214 = vmatpush1.msra.mxu0 0.0
  %215 = vmatprep.subr.mxu0 0.0
  %216 = vmatpush1.msra.mxu0 0.0
  %217 = vmatprep.subr.mxu0 0.0
  %218 = vmatpush1.msra.mxu0 0.0
  %219 = vmatprep.subr.mxu0 0.0
  %220 = vmatpush1.msra.mxu0 0.0
  %221 = vmatprep.subr.mxu0 0.0
  %222 = vmatpush1.msra.mxu0 0.0
  %223 = vmatprep.subr.mxu0 0.0
  %224 = vmatpush1.msra.mxu0 0.0
  %225 = vmatprep.subr.mxu0 0.0
  %226 = vmatpush1.msra.mxu0 0.0
  %227 = vmatprep.subr.mxu0 0.0
  %228 = vmatpush1.msra.mxu0 0.0
  %229 = vmatprep.subr.mxu0 0.0
  %230 = vmatpush1.msra.mxu0 0.0
  %231 = vmatprep.subr.mxu0 0.0
  %232 = vmatpush1.msra.mxu0 0.0
  %233 = vmatprep.subr.mxu0 0.0
  %234 = vmatpush1.msra.mxu0 0.0
  %235 = vmatprep.subr.mxu0 0.0
  %236 = vmatpush1.msra.mxu0 0.0
  %237 = vmatprep.subr.mxu0 0.0
  %238 = vmatpush1.msra.mxu0 0.0
  %239 = vmatprep.subr.mxu0 0.0
  %240 = vmatpush1.msra.mxu0 0.0
  %241 = vmatprep.subr.mxu0 0.0
  %242 = vmatpush1.msra.mxu0 0.0
  %243 = vmatprep.subr.mxu0 0.0
  %244 = vmatpush1.msra.mxu0 0.0
  %245 = vmatprep.mubr.f32.mxu0 0.0
  %246 = vmatmul.mubr.f32.gmra.mrb[0].mxu0 %v15
  %v247 = vpop.f32.mrb[0].mxu0
  %v248 = vadd.f32 %v82, %v247
  %v249 = vpop.f32.mrb[0].mxu0
  %250 = vmatprep.mubr.f32.mxu0 0.0
  %251 = vmatmul.mubr.f32.gmra.mrb[0].mxu0 %v16
  %v252 = vpop.f32.mrb[0].mxu0
  %v253 = vadd.f32 %v83, %v252
  %v254 = vpop.f32.mrb[0].mxu0
  %255 = vdwg.mxu0
  %v256 = vmul.f32 %v248, %v49
  %v257 = vmul.f32 %v253, %v50
  %v258 = vmul.f32 %v248, %v51
  %v259 = vmul.f32 %v253, %v52
  %v260 = vmul.f32 %v248, %v53
  %v261 = vmul.f32 %v253, %v54
  %v262 = vmul.f32 %v248, %v55
  %v263 = vmul.f32 %v253, %v56
  %v264 = vmul.f32 %v248, %v57
  %v265 = vmul.f32 %v253, %v58
  %v266 = vmul.f32 %v248, %v59
  %v267 = vmul.f32 %v253, %v60
  %v268 = vmul.f32 %v248, %v61
  %v269 = vmul.f32 %v253, %v62
  %v270 = vmul.f32 %v248, %v63
  %v271 = vmul.f32 %v253, %v64
  %272 = vmatprep.subr.mxu0 0.0
  %273 = vmatpush1.xpose.msra.mxu0 %v256
  %274 = vmatprep.subr.mxu0 0.0
  %275 = vmatpush1.xpose.msra.mxu0 %v257
  %276 = vmatprep.subr.mxu0 0.0
  %277 = vmatpush1.xpose.msra.mxu0 %v258
  %278 = vmatprep.subr.mxu0 0.0
  %279 = vmatpush1.xpose.msra.mxu0 %v259
  %280 = vmatprep.subr.mxu0 0.0
  %281 = vmatpush1.xpose.msra.mxu0 %v260
  %282 = vmatprep.subr.mxu0 0.0
  %283 = vmatpush1.xpose.msra.mxu0 %v261
  %284 = vmatprep.subr.mxu0 0.0
  %285 = vmatpush1.xpose.msra.mxu0 %v262
  %286 = vmatprep.subr.mxu0 0.0
  %287 = vmatpush1.xpose.msra.mxu0 %v263
  %288 = vmatprep.subr.mxu0 0.0
  %289 = vmatpush1.xpose.msra.mxu0 %v264
  %290 = vmatprep.subr.mxu0 0.0
  %291 = vmatpush1.xpose.msra.mxu0 %v265
  %292 = vmatprep.subr.mxu0 0.0
  %293 = vmatpush1.xpose.msra.mxu0 %v266
  %294 = vmatprep.subr.mxu0 0.0
  %295 = vmatpush1.xpose.msra.mxu0 %v267
  %296 = vmatprep.subr.mxu0 0.0
  %297 = vmatpush1.xpose.msra.mxu0 %v268
  %298 = vmatprep.subr.mxu0 0.0
  %299 = vmatpush1.xpose.msra.mxu0 %v269
  %300 = vmatprep.subr.mxu0 0.0
  %301 = vmatpush1.xpose.msra.mxu0 %v270
  %302 = vmatprep.subr.mxu0 0.0
  %303 = vmatpush1.xpose.msra.mxu0 %v271
  %304 = vmatprep.subr.mxu0 0.0
  %305 = vmatpush1.xpose.msra.mxu0 0.0
  %306 = vmatprep.subr.mxu0 0.0
  %307 = vmatpush1.xpose.msra.mxu0 0.0
  %308 = vmatprep.subr.mxu0 0.0
  %309 = vmatpush1.xpose.msra.mxu0 0.0
  %310 = vmatprep.subr.mxu0 0.0
  %311 = vmatpush1.xpose.msra.mxu0 0.0
  %312 = vmatprep.subr.mxu0 0.0
  %313 = vmatpush1.xpose.msra.mxu0 0.0
  %314 = vmatprep.subr.mxu0 0.0
  %315 = vmatpush1.xpose.msra.mxu0 0.0
  %316 = vmatprep.subr.mxu0 0.0
  %317 = vmatpush1.xpose.msra.mxu0 0.0
  %318 = vmatprep.subr.mxu0 0.0
  %319 = vmatpush1.xpose.msra.mxu0 0.0
  %320 = vmatprep.subr.mxu0 0.0
  %321 = vmatpush1.xpose.msra.mxu0 0.0
  %322 = vmatprep.subr.mxu0 0.0
  %323 = vmatpush1.xpose.msra.mxu0 0.0
  %324 = vmatprep.subr.mxu0 0.0
  %325 = vmatpush1.xpose.msra.mxu0 0.0
  %326 = vmatprep.subr.mxu0 0.0
  %327 = vmatpush1.xpose.msra.mxu0 0.0
  %328 = vmatprep.subr.mxu0 0.0
  %329 = vmatpush1.xpose.msra.mxu0 0.0
  %330 = vmatprep.subr.mxu0 0.0
  %331 = vmatpush1.xpose.msra.mxu0 0.0
  %332 = vmatprep.subr.mxu0 0.0
  %333 = vmatpush1.xpose.msra.mxu0 0.0
  %334 = vmatprep.subr.mxu0 0.0
  %335 = vmatpush1.xpose.msra.mxu0 0.0
  %336 = vmatprep.mubr.f32.mxu0 0.0
  %337 = vmatmul.mubr.f32.gmra.mrb[0].mxu0 %v178
  %v338 = vpop.f32.mrb[0].mxu0
  %v339 = vadd.f32 0.0, %v338
  %v340 = vpop.f32.mrb[0].mxu0
  %341 = vdwg.mxu0
  %342 = vmax.xlane.f32.xlu0 %v339
  %v343 = vpop.xlane.xlu0 %342
  %v344 = vsub.f32 %v339, %v343
  %v345 = vmul.f32 %v344, 1.442695
  %v346 = vpow.pop %v345
  %347 = vmatprep.subr.mxu0 0.0
  %348 = vmatpush1.msra.mxu0 %v65
  %349 = vmatprep.subr.mxu0 0.0
  %350 = vmatpush1.msra.mxu0 %v66
  %351 = vmatprep.subr.mxu0 0.0
  %352 = vmatpush1.msra.mxu0 %v67
  %353 = vmatprep.subr.mxu0 0.0
  %354 = vmatpush1.msra.mxu0 %v68
  %355 = vmatprep.subr.mxu0 0.0
  %356 = vmatpush1.msra.mxu0 %v69
  %357 = vmatprep.subr.mxu0 0.0
  %358 = vmatpush1.msra.mxu0 %v70
  %359 = vmatprep.subr.mxu0 0.0
  %360 = vmatpush1.msra.mxu0 %v71
  %361 = vmatprep.subr.mxu0 0.0
  %362 = vmatpush1.msra.mxu0 %v72
  %363 = vmatprep.subr.mxu0 0.0
  %364 = vmatpush1.msra.mxu0 %v73
  %365 = vmatprep.subr.mxu0 0.0
  %366 = vmatpush1.msra.mxu0 %v74
  %367 = vmatprep.subr.mxu0 0.0
  %368 = vmatpush1.msra.mxu0 %v75
  %369 = vmatprep.subr.mxu0 0.0
  %370 = vmatpush1.msra.mxu0 %v76
  %371 = vmatprep.subr.mxu0 0.0
  %372 = vmatpush1.msra.mxu0 %v77
  %373 = vmatprep.subr.mxu0 0.0
  %374 = vmatpush1.msra.mxu0 %v78
  %375 = vmatprep.subr.mxu0 0.0
  %376 = vmatpush1.msra.mxu0 %v79
  %377 = vmatprep.subr.mxu0 0.0
  %378 = vmatpush1.msra.mxu0 %v80
  %379 = vmatprep.subr.mxu0 0.0
  %380 = vmatpush1.msra.mxu0 0.0
  %381 = vmatprep.subr.mxu0 0.0
  %382 = vmatpush1.msra.mxu0 0.0
  %383 = vmatprep.subr.mxu0 0.0
  %384 = vmatpush1.msra.mxu0 0.0
  %385 = vmatprep.subr.mxu0 0.0
  %386 = vmatpush1.msra.mxu0 0.0
  %387 = vmatprep.subr.mxu0 0.0
  %388 = vmatpush1.msra.mxu0 0.0
  %389 = vmatprep.subr.mxu0 0.0
  %390 = vmatpush1.msra.mxu0 0.0
  %391 = vmatprep.subr.mxu0 0.0
  %392 = vmatpush1.msra.mxu0 0.0
  %393 = vmatprep.subr.mxu0 0.0
  %394 = vmatpush1.msra.mxu0 0.0
  %395 = vmatprep.subr.mxu0 0.0
  %396 = vmatpush1.msra.mxu0 0.0
  %397 = vmatprep.subr.mxu0 0.0
  %398 = vmatpush1.msra.mxu0 0.0
  %399 = vmatprep.subr.mxu0 0.0
  %400 = vmatpush1.msra.mxu0 0.0
  %401 = vmatprep.subr.mxu0 0.0
  %402 = vmatpush1.msra.mxu0 0.0
  %403 = vmatprep.subr.mxu0 0.0
  %404 = vmatpush1.msra.mxu0 0.0
  %405 = vmatprep.subr.mxu0 0.0
  %406 = vmatpush1.msra.mxu0 0.0
  %407 = vmatprep.subr.mxu0 0.0
  %408 = vmatpush1.msra.mxu0 0.0
  %409 = vmatprep.subr.mxu0 0.0
  %410 = vmatpush1.msra.mxu0 0.0
  %411 = vmatprep.mubr.f32.mxu0 0.0
  %412 = vmatmul.mubr.f32.gmra.mrb[0].mxu0 %v346
  %v413 = vpop.f32.mrb[0].mxu0
  %v414 = vadd.f32 0.0, %v413
  %v415 = vpop.f32.mrb[0].mxu0
  %416 = vdwg.mxu0
  %v417 = vrcp.pop %v414
  %v418 = vmul.f32 %v346, %v417
  %419 = vmatprep.subr.mxu0 0.0
  %420 = vmatpush1.msra.mxu0 %v256
  %421 = vmatprep.subr.mxu0 0.0
  %422 = vmatpush1.msra.mxu0 %v257
  %423 = vmatprep.subr.mxu0 0.0
  %424 = vmatpush1.msra.mxu0 %v258
  %425 = vmatprep.subr.mxu0 0.0
  %426 = vmatpush1.msra.mxu0 %v259
  %427 = vmatprep.subr.mxu0 0.0
  %428 = vmatpush1.msra.mxu0 %v260
  %429 = vmatprep.subr.mxu0 0.0
  %430 = vmatpush1.msra.mxu0 %v261
  %431 = vmatprep.subr.mxu0 0.0
  %432 = vmatpush1.msra.mxu0 %v262
  %433 = vmatprep.subr.mxu0 0.0
  %434 = vmatpush1.msra.mxu0 %v263
  %435 = vmatprep.subr.mxu0 0.0
  %436 = vmatpush1.msra.mxu0 %v264
  %437 = vmatprep.subr.mxu0 0.0
  %438 = vmatpush1.msra.mxu0 %v265
  %439 = vmatprep.subr.mxu0 0.0
  %440 = vmatpush1.msra.mxu0 %v266
  %441 = vmatprep.subr.mxu0 0.0
  %442 = vmatpush1.msra.mxu0 %v267
  %443 = vmatprep.subr.mxu0 0.0
  %444 = vmatpush1.msra.mxu0 %v268
  %445 = vmatprep.subr.mxu0 0.0
  %446 = vmatpush1.msra.mxu0 %v269
  %447 = vmatprep.subr.mxu0 0.0
  %448 = vmatpush1.msra.mxu0 %v270
  %449 = vmatprep.subr.mxu0 0.0
  %450 = vmatpush1.msra.mxu0 %v271
  %451 = vmatprep.subr.mxu0 0.0
  %452 = vmatpush1.msra.mxu0 0.0
  %453 = vmatprep.subr.mxu0 0.0
  %454 = vmatpush1.msra.mxu0 0.0
  %455 = vmatprep.subr.mxu0 0.0
  %456 = vmatpush1.msra.mxu0 0.0
  %457 = vmatprep.subr.mxu0 0.0
  %458 = vmatpush1.msra.mxu0 0.0
  %459 = vmatprep.subr.mxu0 0.0
  %460 = vmatpush1.msra.mxu0 0.0
  %461 = vmatprep.subr.mxu0 0.0
  %462 = vmatpush1.msra.mxu0 0.0
  %463 = vmatprep.subr.mxu0 0.0
  %464 = vmatpush1.msra.mxu0 0.0
  %465 = vmatprep.subr.mxu0 0.0
  %466 = vmatpush1.msra.mxu0 0.0
  %467 = vmatprep.subr.mxu0 0.0
  %468 = vmatpush1.msra.mxu0 0.0
  %469 = vmatprep.subr.mxu0 0.0
  %470 = vmatpush1.msra.mxu0 0.0
  %471 = vmatprep.subr.mxu0 0.0
  %472 = vmatpush1.msra.mxu0 0.0
  %473 = vmatprep.subr.mxu0 0.0
  %474 = vmatpush1.msra.mxu0 0.0
  %475 = vmatprep.subr.mxu0 0.0
  %476 = vmatpush1.msra.mxu0 0.0
  %477 = vmatprep.subr.mxu0 0.0
  %478 = vmatpush1.msra.mxu0 0.0
  %479 = vmatprep.subr.mxu0 0.0
  %480 = vmatpush1.msra.mxu0 0.0
  %481 = vmatprep.subr.mxu0 0.0
  %482 = vmatpush1.msra.mxu0 0.0
  %483 = vmatprep.mubr.f32.mxu0 0.0
  %484 = vmatmul.mubr.f32.gmra.mrb[0].mxu0 %v418
  %v485 = vpop.f32.mrb[0].mxu0
  %v486 = vadd.f32 0.0, %v485
  %v487 = vpop.f32.mrb[0].mxu0
  %488 = vdwg.mxu0
  %489 = vmatprep.subr.mxu0 0.0
  %490 = vmatpush1.msra.mxu0 %v84
  %491 = vmatprep.subr.mxu0 0.0
  %492 = vmatpush1.msra.mxu0 %v85
  %493 = vmatprep.subr.mxu0 0.0
  %494 = vmatpush1.msra.mxu0 %v86
  %495 = vmatprep.subr.mxu0 0.0
  %496 = vmatpush1.msra.mxu0 %v87
  %497 = vmatprep.subr.mxu0 0.0
  %498 = vmatpush1.msra.mxu0 %v88
  %499 = vmatprep.subr.mxu0 0.0
  %500 = vmatpush1.msra.mxu0 %v89
  %501 = vmatprep.subr.mxu0 0.0
  %502 = vmatpush1.msra.mxu0 %v90
  %503 = vmatprep.subr.mxu0 0.0
  %504 = vmatpush1.msra.mxu0 %v91
  %505 = vmatprep.subr.mxu0 0.0
  %506 = vmatpush1.msra.mxu0 %v92
  %507 = vmatprep.subr.mxu0 0.0
  %508 = vmatpush1.msra.mxu0 %v93
  %509 = vmatprep.subr.mxu0 0.0
  %510 = vmatpush1.msra.mxu0 %v94
  %511 = vmatprep.subr.mxu0 0.0
  %512 = vmatpush1.msra.mxu0 %v95
  %513 = vmatprep.subr.mxu0 0.0
  %514 = vmatpush1.msra.mxu0 %v96
  %515 = vmatprep.subr.mxu0 0.0
  %516 = vmatpush1.msra.mxu0 %v97
  %517 = vmatprep.subr.mxu0 0.0
  %518 = vmatpush1.msra.mxu0 %v98
  %519 = vmatprep.subr.mxu0 0.0
  %520 = vmatpush1.msra.mxu0 %v99
  %521 = vmatprep.subr.mxu0 0.0
  %522 = vmatpush1.msra.mxu0 0.0
  %523 = vmatprep.subr.mxu0 0.0
  %524 = vmatpush1.msra.mxu0 0.0
  %525 = vmatprep.subr.mxu0 0.0
  %526 = vmatpush1.msra.mxu0 0.0
  %527 = vmatprep.subr.mxu0 0.0
  %528 = vmatpush1.msra.mxu0 0.0
  %529 = vmatprep.subr.mxu0 0.0
  %530 = vmatpush1.msra.mxu0 0.0
  %531 = vmatprep.subr.mxu0 0.0
  %532 = vmatpush1.msra.mxu0 0.0
  %533 = vmatprep.subr.mxu0 0.0
  %534 = vmatpush1.msra.mxu0 0.0
  %535 = vmatprep.subr.mxu0 0.0
  %536 = vmatpush1.msra.mxu0 0.0
  %537 = vmatprep.subr.mxu0 0.0
  %538 = vmatpush1.msra.mxu0 0.0
  %539 = vmatprep.subr.mxu0 0.0
  %540 = vmatpush1.msra.mxu0 0.0
  %541 = vmatprep.subr.mxu0 0.0
  %542 = vmatpush1.msra.mxu0 0.0
  %543 = vmatprep.subr.mxu0 0.0
  %544 = vmatpush1.msra.mxu0 0.0
  %545 = vmatprep.subr.mxu0 0.0
  %546 = vmatpush1.msra.mxu0 0.0
  %547 = vmatprep.subr.mxu0 0.0
  %548 = vmatpush1.msra.mxu0 0.0
  %549 = vmatprep.subr.mxu0 0.0
  %550 = vmatpush1.msra.mxu0 0.0
  %551 = vmatprep.subr.mxu0 0.0
  %552 = vmatpush1.msra.mxu0 0.0
  %553 = vmatprep.mubr.f32.mxu0 0.0
  %554 = vmatmul.mubr.f32.gmra.mrb[0].mxu0 %v486
  %v555 = vpop.f32.mrb[0].mxu0
  %v556 = vadd.f32 %v108, %v555
  %v557 = vpop.f32.mrb[0].mxu0
  %558 = vdwg.mxu0
  %v559 = vadd.f32 %v14, %v556
  %vm560 = vcmask 523264
  %v562 = vsel %vm560, %v559, 0
  %564 = vmatprep.subr.mxu0 0.0
  %565 = vmatpush1.msra.mxu0 %v100
  %566 = vmatprep.subr.mxu0 0.0
  %567 = vmatpush1.msra.mxu0 %v101
  %568 = vmatprep.subr.mxu0 0.0
  %569 = vmatpush1.msra.mxu0 %v102
  %570 = vmatprep.subr.mxu0 0.0
  %571 = vmatpush1.msra.mxu0 %v103
  %572 = vmatprep.subr.mxu0 0.0
  %573 = vmatpush1.msra.mxu0 %v104
  %574 = vmatprep.subr.mxu0 0.0
  %575 = vmatpush1.msra.mxu0 %v105
  %576 = vmatprep.subr.mxu0 0.0
  %577 = vmatpush1.msra.mxu0 %v106
  %578 = vmatprep.subr.mxu0 0.0
  %579 = vmatpush1.msra.mxu0 %v107
  %580 = vmatprep.subr.mxu0 0.0
  %581 = vmatpush1.msra.mxu0 0.0
  %582 = vmatprep.subr.mxu0 0.0
  %583 = vmatpush1.msra.mxu0 0.0
  %584 = vmatprep.subr.mxu0 0.0
  %585 = vmatpush1.msra.mxu0 0.0
  %586 = vmatprep.subr.mxu0 0.0
  %587 = vmatpush1.msra.mxu0 0.0
  %588 = vmatprep.subr.mxu0 0.0
  %589 = vmatpush1.msra.mxu0 0.0
  %590 = vmatprep.subr.mxu0 0.0
  %591 = vmatpush1.msra.mxu0 0.0
  %592 = vmatprep.subr.mxu0 0.0
  %593 = vmatpush1.msra.mxu0 0.0
  %594 = vmatprep.subr.mxu0 0.0
  %595 = vmatpush1.msra.mxu0 0.0
  %596 = vmatprep.subr.mxu0 0.0
  %597 = vmatpush1.msra.mxu0 0.0
  %598 = vmatprep.subr.mxu0 0.0
  %599 = vmatpush1.msra.mxu0 0.0
  %600 = vmatprep.subr.mxu0 0.0
  %601 = vmatpush1.msra.mxu0 0.0
  %602 = vmatprep.subr.mxu0 0.0
  %603 = vmatpush1.msra.mxu0 0.0
  %604 = vmatprep.subr.mxu0 0.0
  %605 = vmatpush1.msra.mxu0 0.0
  %606 = vmatprep.subr.mxu0 0.0
  %607 = vmatpush1.msra.mxu0 0.0
  %608 = vmatprep.subr.mxu0 0.0
  %609 = vmatpush1.msra.mxu0 0.0
  %610 = vmatprep.subr.mxu0 0.0
  %611 = vmatpush1.msra.mxu0 0.0
  %612 = vmatprep.subr.mxu0 0.0
  %613 = vmatpush1.msra.mxu0 0.0
  %614 = vmatprep.subr.mxu0 0.0
  %615 = vmatpush1.msra.mxu0 0.0
  %616 = vmatprep.subr.mxu0 0.0
  %617 = vmatpush1.msra.mxu0 0.0
  %618 = vmatprep.subr.mxu0 0.0
  %619 = vmatpush1.msra.mxu0 0.0
  %620 = vmatprep.subr.mxu0 0.0
  %621 = vmatpush1.msra.mxu0 0.0
  %622 = vmatprep.subr.mxu0 0.0
  %623 = vmatpush1.msra.mxu0 0.0
  %624 = vmatprep.subr.mxu0 0.0
  %625 = vmatpush1.msra.mxu0 0.0
  %626 = vmatprep.subr.mxu0 0.0
  %627 = vmatpush1.msra.mxu0 0.0
  %628 = vmatprep.mubr.f32.mxu0 0.0
  %629 = vmatmul.mubr.f32.gmra.mrb[0].mxu0 %v562
  %v630 = vpop.f32.mrb[0].mxu0
  %v631 = vadd.f32 0.0, %v630
  %v632 = vpop.f32.mrb[0].mxu0
  %633 = vdwg.mxu0
  %v634 = vsub.f32 %v559, %v631
  %v635 = vmul.f32 %v634, %v634
  %v637 = vsel %vm560, %v635, 0
  %639 = vmatprep.subr.mxu0 0.0
  %640 = vmatpush1.msra.mxu0 %v100
  %641 = vmatprep.subr.mxu0 0.0
  %642 = vmatpush1.msra.mxu0 %v101
  %643 = vmatprep.subr.mxu0 0.0
  %644 = vmatpush1.msra.mxu0 %v102
  %645 = vmatprep.subr.mxu0 0.0
  %646 = vmatpush1.msra.mxu0 %v103
  %647 = vmatprep.subr.mxu0 0.0
  %648 = vmatpush1.msra.mxu0 %v104
  %649 = vmatprep.subr.mxu0 0.0
  %650 = vmatpush1.msra.mxu0 %v105
  %651 = vmatprep.subr.mxu0 0.0
  %652 = vmatpush1.msra.mxu0 %v106
  %653 = vmatprep.subr.mxu0 0.0
  %654 = vmatpush1.msra.mxu0 %v107
  %655 = vmatprep.subr.mxu0 0.0
  %656 = vmatpush1.msra.mxu0 0.0
  %657 = vmatprep.subr.mxu0 0.0
  %658 = vmatpush1.msra.mxu0 0.0
  %659 = vmatprep.subr.mxu0 0.0
  %660 = vmatpush1.msra.mxu0 0.0
  %661 = vmatprep.subr.mxu0 0.0
  %662 = vmatpush1.msra.mxu0 0.0
  %663 = vmatprep.subr.mxu0 0.0
  %664 = vmatpush1.msra.mxu0 0.0
  %665 = vmatprep.subr.mxu0 0.0
  %666 = vmatpush1.msra.mxu0 0.0
  %667 = vmatprep.subr.mxu0 0.0
  %668 = vmatpush1.msra.mxu0 0.0
  %669 = vmatprep.subr.mxu0 0.0
  %670 = vmatpush1.msra.mxu0 0.0
  %671 = vmatprep.subr.mxu0 0.0
  %672 = vmatpush1.msra.mxu0 0.0
  %673 = vmatprep.subr.mxu0 0.0
  %674 = vmatpush1.msra.mxu0 0.0
  %675 = vmatprep.subr.mxu0 0.0
  %676 = vmatpush1.msra.mxu0 0.0
  %677 = vmatprep.subr.mxu0 0.0
  %678 = vmatpush1.msra.mxu0 0.0
  %679 = vmatprep.subr.mxu0 0.0
  %680 = vmatpush1.msra.mxu0 0.0
  %681 = vmatprep.subr.mxu0 0.0
  %682 = vmatpush1.msra.mxu0 0.0
  %683 = vmatprep.subr.mxu0 0.0
  %684 = vmatpush1.msra.mxu0 0.0
  %685 = vmatprep.subr.mxu0 0.0
  %686 = vmatpush1.msra.mxu0 0.0
  %687 = vmatprep.subr.mxu0 0.0
  %688 = vmatpush1.msra.mxu0 0.0
  %689 = vmatprep.subr.mxu0 0.0
  %690 = vmatpush1.msra.mxu0 0.0
  %691 = vmatprep.subr.mxu0 0.0
  %692 = vmatpush1.msra.mxu0 0.0
  %693 = vmatprep.subr.mxu0 0.0
  %694 = vmatpush1.msra.mxu0 0.0
  %695 = vmatprep.subr.mxu0 0.0
  %696 = vmatpush1.msra.mxu0 0.0
  %697 = vmatprep.subr.mxu0 0.0
  %698 = vmatpush1.msra.mxu0 0.0
  %699 = vmatprep.subr.mxu0 0.0
  %700 = vmatpush1.msra.mxu0 0.0
  %701 = vmatprep.subr.mxu0 0.0
  %702 = vmatpush1.msra.mxu0 0.0
  %703 = vmatprep.mubr.f32.mxu0 0.0
  %704 = vmatmul.mubr.f32.gmra.mrb[0].mxu0 %v637
  %v705 = vpop.f32.mrb[0].mxu0
  %v706 = vadd.f32 1e-05, %v705
  %v707 = vpop.f32.mrb[0].mxu0
  %708 = vdwg.mxu0
  %v709 = vrsqrt.pop %v706
  %v710 = vmul.f32 %v634, %v709
  %v711 = vmul.f32 %v710, %v109
  %v712 = vadd.f32 %v711, %v110
  %713 = vst.msk [vmem:[%s3] sm:$0xff] %vm560, %v712
  // Predicated region
  $region14: #{cross_attention_layer.1} parent=0 // pred_check
    _
  $region15: #{cross_attention_layer.1} parent=0 // pred_check_branch
    %715 = sbr.rel (0) target = $region17
  $region16: #{cross_attention_layer.1} parent=0 // pred_region
    _
  $region17: #{cross_attention_layer.1} parent=0 // pred_fallthru
    _
  // Predicated region
  $region18: #{cross_attention_layer.1} parent=0 // pred_check
    _
  $region19: #{cross_attention_layer.1} parent=0 // pred_check_branch
    %717 = sbr.rel (0) target = $region21
  $region20: #{cross_attention_layer.1} parent=0 // pred_region
    _
  $region21: #{cross_attention_layer.1} parent=0 // pred_fallthru
    _

</llo_original>
